<compile_context>
chip_gen: v7x
topology: tpu7x:2x2x1
jax: 0.10.0
libtpu: 0.0.40
codegen_flags: <defaults>
</compile_context>

<pallas_src>
import functools

import jax
import jax.numpy as jnp
from jax import lax
from jax.experimental import pallas as pl
from jax.experimental.pallas import tpu as pltpu

HIDDEN_SIZE = 32


def _round_up(x, m):
    return ((x + m - 1) // m) * m


def _softplus(x):
    # PyTorch nn.Softplus(beta=1, threshold=20): linear above threshold.
    return jnp.where(x > 20.0, x, jnp.log1p(jnp.exp(jnp.minimum(x, 20.0))))


def actor_kernel(x_ref, w1_ref, b1_ref, w2_ref, b2_ref, wh_ref, bh_ref,
                 out_ref, *, n_actions):
    x = x_ref[...].astype(jnp.float32)

    # Trunk: Linear -> ReLU -> Linear -> ReLU.
    # NOTE: dots kept in f32 to preserve the PyTorch float32 semantics; on v5e
    # casting x/weights to bf16 (keeping preferred_element_type=f32) would run
    # the MXU at full rate if looser tolerance is acceptable.
    h1 = jnp.dot(x, w1_ref[...], preferred_element_type=jnp.float32) + b1_ref[...]
    h1 = jnp.maximum(h1, 0.0)
    h2 = jnp.dot(h1, w2_ref[...], preferred_element_type=jnp.float32) + b2_ref[...]
    h2 = jnp.maximum(h2, 0.0)

    # Fused heads: one matmul into a lane-dense (TM, 128) slab.
    # Columns [0, n_actions)            -> mean (identity)
    # Columns [n_actions, 2*n_actions)  -> std  (softplus)
    y = jnp.dot(h2, wh_ref[...], preferred_element_type=jnp.float32) + bh_ref[...]
    col = lax.broadcasted_iota(jnp.int32, y.shape, dimension=1)
    is_std = (col >= n_actions) & (col < 2 * n_actions)
    out = jnp.where(is_std, _softplus(y), y)

    out_ref[...] = out.astype(out_ref.dtype)


def actor_net_forward(state, params, *, tm=256):
    """state: (B, obs_size) float32; params: dict of weights (in,out) and biases (1,out)."""
    state = state.astype(jnp.float32)
    B, obs_size = state.shape
    hidden = params["w1"].shape[1]
    n_actions = params["wm"].shape[1]

    # ---- pack the two heads into one lane-dense weight/bias slab ----
    out_pad = max(128, _round_up(2 * n_actions, 128))
    w_head = jnp.zeros((hidden, out_pad), jnp.float32)
    w_head = w_head.at[:, :n_actions].set(params["wm"])
    w_head = w_head.at[:, n_actions:2 * n_actions].set(params["ws"])
    b_head = jnp.zeros((1, out_pad), jnp.float32)
    b_head = b_head.at[:, :n_actions].set(params["bm"][0])
    b_head = b_head.at[:, n_actions:2 * n_actions].set(params["bs"][0])

    # ---- batch tiling: TM rows per grid step (TM multiple of 8) ----
    TM = min(tm, _round_up(B, 8))
    TM = _round_up(TM, 8)
    B_pad = _round_up(B, TM)
    if B_pad != B:
        state = jnp.pad(state, ((0, B_pad - B), (0, 0)))
    grid = (B_pad // TM,)

    resident = lambda shape: pl.BlockSpec(shape, lambda i: (0,) * len(shape))

    kernel = functools.partial(actor_kernel, n_actions=n_actions)
    fused = pl.pallas_call(
        kernel,
        out_shape=jax.ShapeDtypeStruct((B_pad, out_pad), jnp.float32),
        grid=grid,
        in_specs=[
            pl.BlockSpec((TM, obs_size), lambda i: (i, 0)),      # streamed state
            resident((obs_size, hidden)),                        # w1
            resident((1, hidden)),                               # b1
            resident((hidden, hidden)),                          # w2
            resident((1, hidden)),                               # b2
            resident((hidden, out_pad)),                         # fused head W
            resident((1, out_pad)),                              # fused head b
        ],
        out_specs=pl.BlockSpec((TM, out_pad), lambda i: (i, 0)),
        compiler_params=pltpu.CompilerParams(
            dimension_semantics=("parallel",)),
    )(state, params["w1"], params["b1"], params["w2"], params["b2"],
      w_head, b_head)

    mean = fused[:B, :n_actions]
    std = fused[:B, n_actions:2 * n_actions]
    return mean, std


def init_params(key, obs_size, n_actions, hidden=HIDDEN_SIZE):
    ks = jax.random.split(key, 8)
    scale = 0.1
    return {
        "w1": scale * jax.random.normal(ks[0], (obs_size, hidden), jnp.float32),
        "b1": scale * jax.random.normal(ks[1], (1, hidden), jnp.float32),
        "w2": scale * jax.random.normal(ks[2], (hidden, hidden), jnp.float32),
        "b2": scale * jax.random.normal(ks[3], (1, hidden), jnp.float32),
        "wm": scale * jax.random.normal(ks[4], (hidden, n_actions), jnp.float32),
        "bm": scale * jax.random.normal(ks[5], (1, n_actions), jnp.float32),
        "ws": scale * jax.random.normal(ks[6], (hidden, n_actions), jnp.float32),
        "bs": scale * jax.random.normal(ks[7], (1, n_actions), jnp.float32),
    }


def reference_forward(state, p):
    h1 = jnp.maximum(state @ p["w1"] + p["b1"], 0.0)
    h2 = jnp.maximum(h1 @ p["w2"] + p["b2"], 0.0)
    mean = h2 @ p["wm"] + p["bm"]
    std = jax.nn.softplus(h2 @ p["ws"] + p["bs"])
    return mean, std


if __name__ == "__main__":
    obs_size, n_actions = 16, 4
    key = jax.random.PRNGKey(0)
    k_small, k_big, k_params = jax.random.split(key, 3)
    params = init_params(k_params, obs_size, n_actions)

    # Small batch (matches the module's typical per-step call).
    batch = 2
    state = jax.random.normal(k_small, (batch, obs_size), jnp.float32)
    mean, std = actor_net_forward(state, params)
    jax.block_until_ready((mean, std))

    ref_mean, ref_std = reference_forward(state, params)
    assert mean.shape == (batch, n_actions) and std.shape == (batch, n_actions)
    assert jnp.allclose(mean, ref_mean, atol=1e-5, rtol=1e-5)
    assert jnp.allclose(std, ref_std, atol=1e-5, rtol=1e-5)
    assert bool(jnp.all(std > 0.0))

    # Rollout-scale batch: exercises the batch-tiled grid (multiple steps,
    # non-multiple of TM to check padding) and the parallel dimension.
    big_batch = 1000
    big_state = jax.random.normal(k_big, (big_batch, obs_size), jnp.float32)
    b_mean, b_std = actor_net_forward(big_state, params, tm=256)
    jax.block_until_ready((b_mean, b_std))
    rb_mean, rb_std = reference_forward(big_state, params)
    assert b_mean.shape == (big_batch, n_actions)
    assert jnp.allclose(b_mean, rb_mean, atol=1e-5, rtol=1e-5)
    assert jnp.allclose(b_std, rb_std, atol=1e-5, rtol=1e-5)

    print("KERNEL_OK")
</pallas_src>

<mosaic_0001>
module attributes {stable_mosaic.version = 11 : i64} {
  func.func @actor_kernel(%arg0: i32, %arg1: memref<8x16xf32, #tpu.memory_space<vmem>>, %arg2: memref<16x32xf32, #tpu.memory_space<vmem>>, %arg3: memref<1x32xf32, #tpu.memory_space<vmem>>, %arg4: memref<32x32xf32, #tpu.memory_space<vmem>>, %arg5: memref<1x32xf32, #tpu.memory_space<vmem>>, %arg6: memref<32x128xf32, #tpu.memory_space<vmem>>, %arg7: memref<1x128xf32, #tpu.memory_space<vmem>>, %arg8: memref<8x128xf32, #tpu.memory_space<vmem>>) attributes {dimension_semantics = [#tpu.dimension_semantics<parallel>], iteration_bounds = array<i64: 1>, scalar_prefetch = 0 : i64, scratch_operands = 0 : i64, tpu.core_type = #tpu.core_type<tc>, window_params = [{transform_indices = @transform_0, window_bounds = array<i64: 8, 16>}, {pipeline_mode = #tpu.pipeline_mode<synchronous>, transform_indices = @transform_1, window_bounds = array<i64: 16, 32>}, {pipeline_mode = #tpu.pipeline_mode<synchronous>, transform_indices = @transform_2, window_bounds = array<i64: 1, 32>}, {pipeline_mode = #tpu.pipeline_mode<synchronous>, transform_indices = @transform_3, window_bounds = array<i64: 32, 32>}, {pipeline_mode = #tpu.pipeline_mode<synchronous>, transform_indices = @transform_4, window_bounds = array<i64: 1, 32>}, {pipeline_mode = #tpu.pipeline_mode<synchronous>, transform_indices = @transform_5, window_bounds = array<i64: 32, 128>}, {pipeline_mode = #tpu.pipeline_mode<synchronous>, transform_indices = @transform_6, window_bounds = array<i64: 1, 128>}, {transform_indices = @transform_7, window_bounds = array<i64: 8, 128>}]} {
    %c0 = arith.constant 0 : index
    %c0_0 = arith.constant 0 : index
    %0 = vector.load %arg1[%c0, %c0_0] : memref<8x16xf32, #tpu.memory_space<vmem>>, vector<8x16xf32>
    %c0_1 = arith.constant 0 : index
    %c0_2 = arith.constant 0 : index
    %1 = vector.load %arg2[%c0_1, %c0_2] : memref<16x32xf32, #tpu.memory_space<vmem>>, vector<16x32xf32>
    %cst = arith.constant dense<0.000000e+00> : vector<8x32xf32>
    %2 = tpu.matmul %0, %1, %cst {dimension_numbers = #tpu.dot_dimension_numbers<[1], [0], [0], [1], [0, 0, 1, 1], [], []>} : vector<8x16xf32>, vector<16x32xf32>, vector<8x32xf32> -> vector<8x32xf32>
    %c0_3 = arith.constant 0 : index
    %c0_4 = arith.constant 0 : index
    %3 = vector.load %arg3[%c0_3, %c0_4] : memref<1x32xf32, #tpu.memory_space<vmem>>, vector<1x32xf32>
    %4 = vector.broadcast %3 : vector<1x32xf32> to vector<8x32xf32>
    %5 = arith.addf %2, %4 : vector<8x32xf32>
    %cst_5 = arith.constant 0.000000e+00 : f32
    %6 = vector.broadcast %cst_5 : f32 to vector<8x32xf32>
    %7 = arith.maximumf %5, %6 : vector<8x32xf32>
    %c0_6 = arith.constant 0 : index
    %c0_7 = arith.constant 0 : index
    %8 = vector.load %arg4[%c0_6, %c0_7] : memref<32x32xf32, #tpu.memory_space<vmem>>, vector<32x32xf32>
    %cst_8 = arith.constant dense<0.000000e+00> : vector<8x32xf32>
    %9 = tpu.matmul %7, %8, %cst_8 {dimension_numbers = #tpu.dot_dimension_numbers<[1], [0], [0], [1], [0, 0, 1, 1], [], []>} : vector<8x32xf32>, vector<32x32xf32>, vector<8x32xf32> -> vector<8x32xf32>
    %c0_9 = arith.constant 0 : index
    %c0_10 = arith.constant 0 : index
    %10 = vector.load %arg5[%c0_9, %c0_10] : memref<1x32xf32, #tpu.memory_space<vmem>>, vector<1x32xf32>
    %11 = vector.broadcast %10 : vector<1x32xf32> to vector<8x32xf32>
    %12 = arith.addf %9, %11 : vector<8x32xf32>
    %cst_11 = arith.constant 0.000000e+00 : f32
    %13 = vector.broadcast %cst_11 : f32 to vector<8x32xf32>
    %14 = arith.maximumf %12, %13 : vector<8x32xf32>
    %c0_12 = arith.constant 0 : index
    %c0_13 = arith.constant 0 : index
    %15 = vector.load %arg6[%c0_12, %c0_13] : memref<32x128xf32, #tpu.memory_space<vmem>>, vector<32x128xf32>
    %cst_14 = arith.constant dense<0.000000e+00> : vector<8x128xf32>
    %16 = tpu.matmul %14, %15, %cst_14 {dimension_numbers = #tpu.dot_dimension_numbers<[1], [0], [0], [1], [0, 0, 1, 1], [], []>} : vector<8x32xf32>, vector<32x128xf32>, vector<8x128xf32> -> vector<8x128xf32>
    %c0_15 = arith.constant 0 : index
    %c0_16 = arith.constant 0 : index
    %17 = vector.load %arg7[%c0_15, %c0_16] : memref<1x128xf32, #tpu.memory_space<vmem>>, vector<1x128xf32>
    %18 = vector.broadcast %17 : vector<1x128xf32> to vector<8x128xf32>
    %19 = arith.addf %16, %18 : vector<8x128xf32>
    %20 = tpu.iota {dimensions = array<i32: 1>} : vector<8x128xi32>
    %c4_i32 = arith.constant 4 : i32
    %21 = vector.broadcast %c4_i32 : i32 to vector<8x128xi32>
    %22 = arith.cmpi sge, %20, %21 : vector<8x128xi32>
    %c8_i32 = arith.constant 8 : i32
    %23 = vector.broadcast %c8_i32 : i32 to vector<8x128xi32>
    %24 = arith.cmpi slt, %20, %23 : vector<8x128xi32>
    %25 = arith.andi %22, %24 : vector<8x128xi1>
    %cst_17 = arith.constant 2.000000e+01 : f32
    %26 = vector.broadcast %cst_17 : f32 to vector<8x128xf32>
    %27 = arith.cmpf ogt, %19, %26 : vector<8x128xf32>
    %cst_18 = arith.constant 2.000000e+01 : f32
    %28 = vector.broadcast %cst_18 : f32 to vector<8x128xf32>
    %29 = arith.minimumf %19, %28 : vector<8x128xf32>
    %30 = math.exp %29 : vector<8x128xf32>
    %31 = math.log1p %30 : vector<8x128xf32>
    %32 = arith.select %27, %19, %31 : vector<8x128xi1>, vector<8x128xf32>
    %33 = arith.select %25, %32, %19 : vector<8x128xi1>, vector<8x128xf32>
    %c0_19 = arith.constant 0 : index
    %c0_20 = arith.constant 0 : index
    %34 = vector.load %arg8[%c0_19, %c0_20] : memref<8x128xf32, #tpu.memory_space<vmem>>, vector<8x128xf32>
    tpu.vector_store %arg8[%c0_19, %c0_20], %33 {strides = array<i32>} : memref<8x128xf32, #tpu.memory_space<vmem>>, vector<8x128xf32>,
    return
  }
  func.func @transform_0(%arg0: i32) -> (i32, i32) {
    %c0_i32 = arith.constant 0 : i32
    %c0_i32_0 = arith.constant 0 : i32
    return %arg0, %c0_i32 : i32, i32
  }
  func.func @transform_1(%arg0: i32) -> (i32, i32) {
    %c0_i32 = arith.constant 0 : i32
    %c0_i32_0 = arith.constant 0 : i32
    %c0_i32_1 = arith.constant 0 : i32
    return %c0_i32, %c0_i32_0 : i32, i32
  }
  func.func @transform_2(%arg0: i32) -> (i32, i32) {
    %c0_i32 = arith.constant 0 : i32
    %c0_i32_0 = arith.constant 0 : i32
    %c0_i32_1 = arith.constant 0 : i32
    return %c0_i32, %c0_i32_0 : i32, i32
  }
  func.func @transform_3(%arg0: i32) -> (i32, i32) {
    %c0_i32 = arith.constant 0 : i32
    %c0_i32_0 = arith.constant 0 : i32
    %c0_i32_1 = arith.constant 0 : i32
    return %c0_i32, %c0_i32_0 : i32, i32
  }
  func.func @transform_4(%arg0: i32) -> (i32, i32) {
    %c0_i32 = arith.constant 0 : i32
    %c0_i32_0 = arith.constant 0 : i32
    %c0_i32_1 = arith.constant 0 : i32
    return %c0_i32, %c0_i32_0 : i32, i32
  }
  func.func @transform_5(%arg0: i32) -> (i32, i32) {
    %c0_i32 = arith.constant 0 : i32
    %c0_i32_0 = arith.constant 0 : i32
    %c0_i32_1 = arith.constant 0 : i32
    return %c0_i32, %c0_i32_0 : i32, i32
  }
  func.func @transform_6(%arg0: i32) -> (i32, i32) {
    %c0_i32 = arith.constant 0 : i32
    %c0_i32_0 = arith.constant 0 : i32
    %c0_i32_1 = arith.constant 0 : i32
    return %c0_i32, %c0_i32_0 : i32, i32
  }
  func.func @transform_7(%arg0: i32) -> (i32, i32) {
    %c0_i32 = arith.constant 0 : i32
    %c0_i32_0 = arith.constant 0 : i32
    return %arg0, %c0_i32 : i32, i32
  }
}

</mosaic_0001>

<llo_original>
// kernel: tpu_custom_call.1
$region0: #{tpu_custom_call.1}
  #allocation0 [shape = 'u32[]', space=smem, size = 0x4, offset = 0x4, fixed_abs, tag = 'smem constant byte address 0x4 - core index']
  #allocation1 [shape = 'u32[144,128]{1,0:T(1,128)}', space=vmem, size = 0x12000, scoped, tag = 'internal scratch']
  %s0 = inlined_call_operand.hbm [shape: f32[8,16], index: 0, kind: input, shape index: {}]
  %s1 = inlined_call_operand.hbm [shape: f32[16,32], index: 1, kind: input, shape index: {}]
  %s2 = inlined_call_operand.vmem [shape: f32[1,32], index: 2, kind: input, shape index: {}]
  %s3 = inlined_call_operand.hbm [shape: f32[32,32], index: 3, kind: input, shape index: {}]
  %s4 = inlined_call_operand.vmem [shape: f32[1,32], index: 4, kind: input, shape index: {}]
  %s5 = inlined_call_operand.hbm [shape: f32[32,128], index: 5, kind: input, shape index: {}]
  %s6 = inlined_call_operand.vmem [shape: f32[1,128], index: 6, kind: input, shape index: {}]
  %s7 = inlined_call_operand.hbm [shape: f32[8,128], index: 7, kind: output, shape index: {}]
  %s8 = sld [smem:[#allocation0]]
  $region54: #{tpu_custom_call.1} parent=0
    _
  %s10 = ssub.s32 1, %s8
  %s11 = scalar_select 0, %s10, %s8
  $region1: #{tpu_custom_call.1} parent=0
    #allocation2 [shape = 'u8[4096]{0}', space=vmem, size = 0x1000, scoped, tag = 'input window, operand 0, single buffered']
    #allocation3 [shape = 's32[1]{0}', space=sflag, size = 0x4, scoped, tag = 'scoped memory for tpu_custom_call.1']
    #allocation4 [shape = 's32[1]{0}', space=sflag, size = 0x4, scoped, tag = 'scoped memory for tpu_custom_call.1']
    #allocation5 [shape = 'u8[8192]{0}', space=vmem, size = 0x2000, scoped, tag = 'input window, operand 1, single buffered']
    #allocation6 [shape = 's32[1]{0}', space=sflag, size = 0x4, scoped, tag = 'scoped memory for tpu_custom_call.1']
    #allocation7 [shape = 'u8[16384]{0}', space=vmem, size = 0x4000, scoped, tag = 'input window, operand 3, single buffered']
    #allocation8 [shape = 'u8[16384]{0}', space=vmem, size = 0x4000, scoped, tag = 'input window, operand 5, single buffered']
    #allocation9 [shape = 's32[1]{0}', space=sflag, size = 0x4, scoped, tag = 'scoped memory for tpu_custom_call.1']
    #allocation10 [shape = 'u8[4096]{0}', space=vmem, size = 0x1000, scoped, tag = 'output window, operand 0, single buffered']
    %12 = vsyncpa [#allocation3], 0
    %13 = vsyncpa [#allocation6], 0
    %14 = vsyncpa [#allocation9], 0
    %15 = vsyncpa [#allocation4], 0
    // Predicated region
    $region2: #{tpu_custom_call.1} parent=1 // pred_check
      _
    $region3: #{tpu_custom_call.1} parent=1 // pred_check_branch
      %17 = sbr.rel (0) target = $region5
    $region4: #{tpu_custom_call.1} parent=1 // pred_region
      %s19 = ssub.s32 128, 128
      %20 = vsyncadd [#allocation3], %s19
      %s22 = sshll.u32 [#allocation2], 4
      %s23 = int_to_ptr.vmem [resolvable:$true] %s22
      %25 = dma.hbm_to_vmem [thread:$0]  %s0, 128, %s23, [#allocation3]
    $region5: #{tpu_custom_call.1} parent=1 // pred_fallthru
      _
    // Predicated region
    $region6: #{tpu_custom_call.1} parent=1 // pred_check
      _
    $region7: #{tpu_custom_call.1} parent=1 // pred_check_branch
      %27 = sbr.rel (0) target = $region9
    $region8: #{tpu_custom_call.1} parent=1 // pred_region
      %s29 = ssub.s32 256, 256
      %30 = vsyncadd [#allocation6], %s29
      %s31 = sshll.u32 [#allocation5], 4
      %s32 = int_to_ptr.vmem [resolvable:$true] %s31
      %37 = dma.hbm_to_vmem [thread:$0]  %s1, 256, %s32, [#allocation6], 128, 128, 8
    $region9: #{tpu_custom_call.1} parent=1 // pred_fallthru
      _
    // Predicated region
    $region10: #{tpu_custom_call.1} parent=1 // pred_check
      _
    $region11: #{tpu_custom_call.1} parent=1 // pred_check_branch
      %39 = sbr.rel (0) target = $region13
    $region12: #{tpu_custom_call.1} parent=1 // pred_region
      _
    $region13: #{tpu_custom_call.1} parent=1 // pred_fallthru
      _
    // Predicated region
    $region14: #{tpu_custom_call.1} parent=1 // pred_check
      _
    $region15: #{tpu_custom_call.1} parent=1 // pred_check_branch
      %41 = sbr.rel (0) target = $region17
    $region16: #{tpu_custom_call.1} parent=1 // pred_region
      %s43 = ssub.s32 512, 512
      %44 = vsyncadd [#allocation6], %s43
      %s45 = sshll.u32 [#allocation7], 4
      %s46 = int_to_ptr.vmem [resolvable:$true] %s45
      %51 = dma.hbm_to_vmem [thread:$0]  %s3, 512, %s46, [#allocation6], 128, 128, 8
    $region17: #{tpu_custom_call.1} parent=1 // pred_fallthru
      _
    // Predicated region
    $region18: #{tpu_custom_call.1} parent=1 // pred_check
      _
    $region19: #{tpu_custom_call.1} parent=1 // pred_check_branch
      %53 = sbr.rel (0) target = $region21
    $region20: #{tpu_custom_call.1} parent=1 // pred_region
      _
    $region21: #{tpu_custom_call.1} parent=1 // pred_fallthru
      _
    // Predicated region
    $region22: #{tpu_custom_call.1} parent=1 // pred_check
      _
    $region23: #{tpu_custom_call.1} parent=1 // pred_check_branch
      %55 = sbr.rel (0) target = $region25
    $region24: #{tpu_custom_call.1} parent=1 // pred_region
      %s57 = ssub.s32 512, 512
      %58 = vsyncadd [#allocation9], %s57
      %s59 = sshll.u32 [#allocation8], 4
      %s60 = int_to_ptr.vmem [resolvable:$true] %s59
      %65 = dma.hbm_to_vmem [thread:$0]  %s5, 512, %s60, [#allocation9], 128, 128, 8
    $region25: #{tpu_custom_call.1} parent=1 // pred_fallthru
      _
    // Predicated region
    $region26: #{tpu_custom_call.1} parent=1 // pred_check
      _
    $region27: #{tpu_custom_call.1} parent=1 // pred_check_branch
      %67 = sbr.rel (0) target = $region29
    $region28: #{tpu_custom_call.1} parent=1 // pred_region
      _
    $region29: #{tpu_custom_call.1} parent=1 // pred_fallthru
      _
    // Predicated region
    $region30: #{tpu_custom_call.1} parent=1 // pred_check
      _
    $region31: #{tpu_custom_call.1} parent=1 // pred_check_branch
      %69 = sbr.rel (0) target = $region33
    $region32: #{tpu_custom_call.1} parent=1 // pred_region
      %70 = dma.done [#allocation3], 128
    $region33: #{tpu_custom_call.1} parent=1 // pred_fallthru
      _
    // Predicated region
    $region34: #{tpu_custom_call.1} parent=1 // pred_check
      _
    $region35: #{tpu_custom_call.1} parent=1 // pred_check_branch
      %72 = sbr.rel (0) target = $region37
    $region36: #{tpu_custom_call.1} parent=1 // pred_region
      %73 = dma.done [#allocation6], 256
    $region37: #{tpu_custom_call.1} parent=1 // pred_fallthru
      _
    // Predicated region
    $region38: #{tpu_custom_call.1} parent=1 // pred_check
      _
    $region39: #{tpu_custom_call.1} parent=1 // pred_check_branch
      %75 = sbr.rel (0) target = $region41
    $region40: #{tpu_custom_call.1} parent=1 // pred_region
      %76 = dma.done [#allocation6], 512
    $region41: #{tpu_custom_call.1} parent=1 // pred_fallthru
      _
    // Predicated region
    $region42: #{tpu_custom_call.1} parent=1 // pred_check
      _
    $region43: #{tpu_custom_call.1} parent=1 // pred_check_branch
      %78 = sbr.rel (0) target = $region45
    $region44: #{tpu_custom_call.1} parent=1 // pred_region
      %79 = dma.done [#allocation9], 512
    $region45: #{tpu_custom_call.1} parent=1 // pred_fallthru
      _
    %v80 = vld [vmem:[#allocation2] sm:$0xff]
    %v81 = vld [vmem:[#allocation5] sm:$0xff]
    %v82 = vld [vmem:[#allocation5 + $0x8] sm:$0xff]
    %v83 = vld [vmem:[%s2] sm:$0x1]
    %v85 = vlaneseq
    %v86 = vshrl.u32 %v85, 7
    %v87 = vsub.s32 0, %v86
    %v88 = vrot.slane %v83, %v87
    %vm90 = vcmask 130048
    %v92 = vsel %vm90, %v80, 0
    %94 = vmatprep.subr.mxu0 0.0
    %95 = vmatpush1.msra.mxu0 %v81
    %96 = vmatprep.subr.mxu0 0.0
    %97 = vmatpush1.msra.mxu0 %v82
    %98 = vmatprep.subr.mxu0 0.0
    %99 = vmatpush1.msra.mxu0 0.0
    %100 = vmatprep.subr.mxu0 0.0
    %101 = vmatpush1.msra.mxu0 0.0
    %102 = vmatprep.subr.mxu0 0.0
    %103 = vmatpush1.msra.mxu0 0.0
    %104 = vmatprep.subr.mxu0 0.0
    %105 = vmatpush1.msra.mxu0 0.0
    %106 = vmatprep.subr.mxu0 0.0
    %107 = vmatpush1.msra.mxu0 0.0
    %108 = vmatprep.subr.mxu0 0.0
    %109 = vmatpush1.msra.mxu0 0.0
    %110 = vmatprep.subr.mxu0 0.0
    %111 = vmatpush1.msra.mxu0 0.0
    %112 = vmatprep.subr.mxu0 0.0
    %113 = vmatpush1.msra.mxu0 0.0
    %114 = vmatprep.subr.mxu0 0.0
    %115 = vmatpush1.msra.mxu0 0.0
    %116 = vmatprep.subr.mxu0 0.0
    %117 = vmatpush1.msra.mxu0 0.0
    %118 = vmatprep.subr.mxu0 0.0
    %119 = vmatpush1.msra.mxu0 0.0
    %120 = vmatprep.subr.mxu0 0.0
    %121 = vmatpush1.msra.mxu0 0.0
    %122 = vmatprep.subr.mxu0 0.0
    %123 = vmatpush1.msra.mxu0 0.0
    %124 = vmatprep.subr.mxu0 0.0
    %125 = vmatpush1.msra.mxu0 0.0
    %126 = vmatprep.subr.mxu0 0.0
    %127 = vmatpush1.msra.mxu0 0.0
    %128 = vmatprep.subr.mxu0 0.0
    %129 = vmatpush1.msra.mxu0 0.0
    %130 = vmatprep.subr.mxu0 0.0
    %131 = vmatpush1.msra.mxu0 0.0
    %132 = vmatprep.subr.mxu0 0.0
    %133 = vmatpush1.msra.mxu0 0.0
    %134 = vmatprep.subr.mxu0 0.0
    %135 = vmatpush1.msra.mxu0 0.0
    %136 = vmatprep.subr.mxu0 0.0
    %137 = vmatpush1.msra.mxu0 0.0
    %138 = vmatprep.subr.mxu0 0.0
    %139 = vmatpush1.msra.mxu0 0.0
    %140 = vmatprep.subr.mxu0 0.0
    %141 = vmatpush1.msra.mxu0 0.0
    %142 = vmatprep.subr.mxu0 0.0
    %143 = vmatpush1.msra.mxu0 0.0
    %144 = vmatprep.subr.mxu0 0.0
    %145 = vmatpush1.msra.mxu0 0.0
    %146 = vmatprep.subr.mxu0 0.0
    %147 = vmatpush1.msra.mxu0 0.0
    %148 = vmatprep.subr.mxu0 0.0
    %149 = vmatpush1.msra.mxu0 0.0
    %150 = vmatprep.subr.mxu0 0.0
    %151 = vmatpush1.msra.mxu0 0.0
    %152 = vmatprep.subr.mxu0 0.0
    %153 = vmatpush1.msra.mxu0 0.0
    %154 = vmatprep.subr.mxu0 0.0
    %155 = vmatpush1.msra.mxu0 0.0
    %156 = vmatprep.subr.mxu0 0.0
    %157 = vmatpush1.msra.mxu0 0.0
    %158 = vmatprep.mubr.f32.mxu0 0.0
    %159 = vmatmul.mubr.f32.gmra.mrb[0].mxu0 %v92
    %v160 = vpop.f32.mrb[0].mxu0
    %v161 = vadd.f32 %v88, %v160
    %v162 = vpop.f32.mrb[0].mxu0
    %163 = vdwg.mxu0
    %v164 = vmax.f32 %v161, 0.0
    %v165 = vld [vmem:[#allocation7] sm:$0xff]
    %v166 = vld [vmem:[#allocation7 + $0x8] sm:$0xff]
    %v167 = vld [vmem:[#allocation7 + $0x10] sm:$0xff]
    %v168 = vld [vmem:[#allocation7 + $0x18] sm:$0xff]
    %v169 = vld [vmem:[%s4] sm:$0x1]
    %v171 = vlaneseq
    %v172 = vshrl.u32 %v171, 7
    %v173 = vsub.s32 0, %v172
    %v174 = vrot.slane %v169, %v173
    %vm176 = vcmask 261120
    %v178 = vsel %vm176, %v164, 0
    %180 = vmatprep.subr.mxu0 0.0
    %181 = vmatpush1.msra.mxu0 %v165
    %182 = vmatprep.subr.mxu0 0.0
    %183 = vmatpush1.msra.mxu0 %v166
    %184 = vmatprep.subr.mxu0 0.0
    %185 = vmatpush1.msra.mxu0 %v167
    %186 = vmatprep.subr.mxu0 0.0
    %187 = vmatpush1.msra.mxu0 %v168
    %188 = vmatprep.subr.mxu0 0.0
    %189 = vmatpush1.msra.mxu0 0.0
    %190 = vmatprep.subr.mxu0 0.0
    %191 = vmatpush1.msra.mxu0 0.0
    %192 = vmatprep.subr.mxu0 0.0
    %193 = vmatpush1.msra.mxu0 0.0
    %194 = vmatprep.subr.mxu0 0.0
    %195 = vmatpush1.msra.mxu0 0.0
    %196 = vmatprep.subr.mxu0 0.0
    %197 = vmatpush1.msra.mxu0 0.0
    %198 = vmatprep.subr.mxu0 0.0
    %199 = vmatpush1.msra.mxu0 0.0
    %200 = vmatprep.subr.mxu0 0.0
    %201 = vmatpush1.msra.mxu0 0.0
    %202 = vmatprep.subr.mxu0 0.0
    %203 = vmatpush1.msra.mxu0 0.0
    %204 = vmatprep.subr.mxu0 0.0
    %205 = vmatpush1.msra.mxu0 0.0
    %206 = vmatprep.subr.mxu0 0.0
    %207 = vmatpush1.msra.mxu0 0.0
    %208 = vmatprep.subr.mxu0 0.0
    %209 = vmatpush1.msra.mxu0 0.0
    %210 = vmatprep.subr.mxu0 0.0
    %211 = vmatpush1.msra.mxu0 0.0
    %212 = vmatprep.subr.mxu0 0.0
    %213 = vmatpush1.msra.mxu0 0.0
    %214 = vmatprep.subr.mxu0 0.0
    %215 = vmatpush1.msra.mxu0 0.0
    %216 = vmatprep.subr.mxu0 0.0
    %217 = vmatpush1.msra.mxu0 0.0
    %218 = vmatprep.subr.mxu0 0.0
    %219 = vmatpush1.msra.mxu0 0.0
    %220 = vmatprep.subr.mxu0 0.0
    %221 = vmatpush1.msra.mxu0 0.0
    %222 = vmatprep.subr.mxu0 0.0
    %223 = vmatpush1.msra.mxu0 0.0
    %224 = vmatprep.subr.mxu0 0.0
    %225 = vmatpush1.msra.mxu0 0.0
    %226 = vmatprep.subr.mxu0 0.0
    %227 = vmatpush1.msra.mxu0 0.0
    %228 = vmatprep.subr.mxu0 0.0
    %229 = vmatpush1.msra.mxu0 0.0
    %230 = vmatprep.subr.mxu0 0.0
    %231 = vmatpush1.msra.mxu0 0.0
    %232 = vmatprep.subr.mxu0 0.0
    %233 = vmatpush1.msra.mxu0 0.0
    %234 = vmatprep.subr.mxu0 0.0
    %235 = vmatpush1.msra.mxu0 0.0
    %236 = vmatprep.subr.mxu0 0.0
    %237 = vmatpush1.msra.mxu0 0.0
    %238 = vmatprep.subr.mxu0 0.0
    %239 = vmatpush1.msra.mxu0 0.0
    %240 = vmatprep.subr.mxu0 0.0
    %241 = vmatpush1.msra.mxu0 0.0
    %242 = vmatprep.subr.mxu0 0.0
    %243 = vmatpush1.msra.mxu0 0.0
    %244 = vmatprep.mubr.f32.mxu0 0.0
    %245 = vmatmul.mubr.f32.gmra.mrb[0].mxu0 %v178
    %v246 = vpop.f32.mrb[0].mxu0
    %v247 = vadd.f32 %v174, %v246
    %v248 = vpop.f32.mrb[0].mxu0
    %249 = vdwg.mxu0
    %v250 = vmax.f32 %v247, 0.0
    %v251 = vld [vmem:[#allocation8] sm:$0xff]
    %v252 = vld [vmem:[#allocation8 + $0x8] sm:$0xff]
    %v253 = vld [vmem:[#allocation8 + $0x10] sm:$0xff]
    %v254 = vld [vmem:[#allocation8 + $0x18] sm:$0xff]
    %v255 = vld [vmem:[%s6] sm:$0x1]
    %v257 = vlaneseq
    %v258 = vshrl.u32 %v257, 7
    %v259 = vsub.s32 0, %v258
    %v260 = vrot.slane %v255, %v259
    %v263 = vsel %vm176, %v250, 0
    %265 = vmatprep.subr.mxu0 0.0
    %266 = vmatpush1.msra.mxu0 %v251
    %267 = vmatprep.subr.mxu0 0.0
    %268 = vmatpush1.msra.mxu0 %v252
    %269 = vmatprep.subr.mxu0 0.0
    %270 = vmatpush1.msra.mxu0 %v253
    %271 = vmatprep.subr.mxu0 0.0
    %272 = vmatpush1.msra.mxu0 %v254
    %273 = vmatprep.subr.mxu0 0.0
    %274 = vmatpush1.msra.mxu0 0.0
    %275 = vmatprep.subr.mxu0 0.0
    %276 = vmatpush1.msra.mxu0 0.0
    %277 = vmatprep.subr.mxu0 0.0
    %278 = vmatpush1.msra.mxu0 0.0
    %279 = vmatprep.subr.mxu0 0.0
    %280 = vmatpush1.msra.mxu0 0.0
    %281 = vmatprep.subr.mxu0 0.0
    %282 = vmatpush1.msra.mxu0 0.0
    %283 = vmatprep.subr.mxu0 0.0
    %284 = vmatpush1.msra.mxu0 0.0
    %285 = vmatprep.subr.mxu0 0.0
    %286 = vmatpush1.msra.mxu0 0.0
    %287 = vmatprep.subr.mxu0 0.0
    %288 = vmatpush1.msra.mxu0 0.0
    %289 = vmatprep.subr.mxu0 0.0
    %290 = vmatpush1.msra.mxu0 0.0
    %291 = vmatprep.subr.mxu0 0.0
    %292 = vmatpush1.msra.mxu0 0.0
    %293 = vmatprep.subr.mxu0 0.0
    %294 = vmatpush1.msra.mxu0 0.0
    %295 = vmatprep.subr.mxu0 0.0
    %296 = vmatpush1.msra.mxu0 0.0
    %297 = vmatprep.subr.mxu0 0.0
    %298 = vmatpush1.msra.mxu0 0.0
    %299 = vmatprep.subr.mxu0 0.0
    %300 = vmatpush1.msra.mxu0 0.0
    %301 = vmatprep.subr.mxu0 0.0
    %302 = vmatpush1.msra.mxu0 0.0
    %303 = vmatprep.subr.mxu0 0.0
    %304 = vmatpush1.msra.mxu0 0.0
    %305 = vmatprep.subr.mxu0 0.0
    %306 = vmatpush1.msra.mxu0 0.0
    %307 = vmatprep.subr.mxu0 0.0
    %308 = vmatpush1.msra.mxu0 0.0
    %309 = vmatprep.subr.mxu0 0.0
    %310 = vmatpush1.msra.mxu0 0.0
    %311 = vmatprep.subr.mxu0 0.0
    %312 = vmatpush1.msra.mxu0 0.0
    %313 = vmatprep.subr.mxu0 0.0
    %314 = vmatpush1.msra.mxu0 0.0
    %315 = vmatprep.subr.mxu0 0.0
    %316 = vmatpush1.msra.mxu0 0.0
    %317 = vmatprep.subr.mxu0 0.0
    %318 = vmatpush1.msra.mxu0 0.0
    %319 = vmatprep.subr.mxu0 0.0
    %320 = vmatpush1.msra.mxu0 0.0
    %321 = vmatprep.subr.mxu0 0.0
    %322 = vmatpush1.msra.mxu0 0.0
    %323 = vmatprep.subr.mxu0 0.0
    %324 = vmatpush1.msra.mxu0 0.0
    %325 = vmatprep.subr.mxu0 0.0
    %326 = vmatpush1.msra.mxu0 0.0
    %327 = vmatprep.subr.mxu0 0.0
    %328 = vmatpush1.msra.mxu0 0.0
    %329 = vmatprep.mubr.f32.mxu0 0.0
    %330 = vmatmul.mubr.f32.gmra.mrb[0].mxu0 %v263
    %v331 = vpop.f32.mrb[0].mxu0
    %v332 = vadd.f32 %v260, %v331
    %v333 = vpop.f32.mrb[0].mxu0
    %334 = vdwg.mxu0
    %v335 = vlaneseq
    %v336 = vand.u32 %v335, 127
    %vm337 = vcmp.ge.s32.totalorder %v336, 4
    %vm338 = vcmp.lt.s32.totalorder %v336, 8
    %vm339 = vmand %vm337, %vm338
    %vm340 = vcmp.gt.f32.partialorder %v332, 20.0
    %v341 = vmin.f32 %v332, 20.0
    %v342 = vmul.f32 %v341, 1.442695
    %v343 = vpow.pop %v342
    %v344 = vadd.f32 %v343, 1.0
    %v345 = vlog2.pop %v344
    %v346 = vmul.f32 %v345, 0.6931472
    %v347 = vmul.f32 -0.5, %v343
    %v348 = vadd.f32 %v347, 1.0
    %v349 = vmul.f32 %v348, %v343
    %v350 = vand.u32 2147483647, %v343
    %vm351 = vcmp.lt.f32.partialorder %v350, 0.0004427343
    %v352 = vsel %vm351, %v349, %v346
    %v353 = vsel %vm340, %v332, %v352
    %v354 = vsel %vm339, %v353, %v332
    %355 = vst [vmem:[#allocation10] sm:$0xff] %v354
    // Predicated region
    $region46: #{tpu_custom_call.1} parent=1 // pred_check
      _
    $region47: #{tpu_custom_call.1} parent=1 // pred_check_branch
      %357 = sbr.rel (0) target = $region49
    $region48: #{tpu_custom_call.1} parent=1 // pred_region
      %s359 = ssub.s32 128, 128
      %360 = vsyncadd [#allocation4], %s359
      %s362 = sshll.u32 [#allocation10], 4
      %s363 = int_to_ptr.vmem [resolvable:$true] %s362
      %365 = dma.vmem_to_hbm [thread:$0]  %s363, 128, %s7, [#allocation4]
    $region49: #{tpu_custom_call.1} parent=1 // pred_fallthru
      _
    // Predicated region
    $region50: #{tpu_custom_call.1} parent=1 // pred_check
      _
    $region51: #{tpu_custom_call.1} parent=1 // pred_check_branch
      %367 = sbr.rel (0) target = $region53
    $region52: #{tpu_custom_call.1} parent=1 // pred_region
      %368 = dma.done [#allocation4], 128
    $region53: #{tpu_custom_call.1} parent=1 // pred_fallthru
      _
    %369 = vsyncpa [#allocation3], 1
    %370 = vsyncpa [#allocation6], 1
    %371 = vsyncpa [#allocation9], 1
    %372 = vsyncpa [#allocation4], 1

</llo_original>
